<compile_context>
chip_gen: v5e
topology: v5e:2x2
jax: 0.10.0
libtpu: 0.0.40
codegen_flags: <defaults>
</compile_context>

<pallas_src>
import math

import jax
import jax.numpy as jnp
from jax.experimental import pallas as pl
from jax.experimental.pallas import tpu as pltpu


def _softplus(x):
    # numerically stable softplus
    # TODO(synk): torch.nn.Softplus uses a threshold=20 linear branch; this form
    # is stable and agrees to fp32 tolerance.
    return jnp.maximum(x, 0.0) + jnp.log1p(jnp.exp(-jnp.abs(x)))


def _round_up(x, m):
    return ((x + m - 1) // m) * m


def global_energy_kernel(ge_ref, y1_ref, w1_ref, w2_ref, out_ref, le_ref):
    """One (tile_i, tile_j) block of out[i, j] = label_energy[i] + global_energy[j]."""
    # Hoist the tiny MLP out of the inner j loop: compute once per row-block.
    @pl.when(pl.program_id(1) == 0)
    def _():
        h = jnp.dot(y1_ref[...], w1_ref[...],
                    preferred_element_type=jnp.float32)            # (TI, H)
        h = _softplus(h)
        # N=1 second Linear as a VPU multiply + lane reduce (skips a 1-col MXU pass).
        le_ref[...] = jnp.sum(h * w2_ref[...], axis=-1, keepdims=True)  # (TI, 1)

    # Steady state: broadcast add + lane-dense store (HBM write bound).
    out_ref[...] = le_ref[...] + ge_ref[...]                        # (TI, TJ)


def prepare_weights(w1, w2):
    """One-time relayout of the PyTorch nn.Linear weights (outside the hot path).

    w1: (H, L) -> (L, H) so the kernel does y1 @ w1_t.
    w2: (1, H) stays a lane-dense row (consumed by a VPU reduce, not a matmul).
    """
    return jnp.asarray(w1).T, jnp.asarray(w2)


def global_energy_network(ys, potentials, w1_t, w2_row, *,
                          tile_i_max=512, tile_j_max=2048):
    """ys, potentials: (B, L, K) f32; w1_t: (L, H); w2_row: (1, H).

    Returns (B, B) for B > 1 (faithful to the PyTorch broadcast) and (1,) for B == 1.
    Default tile caps (512, 2048) are safe on v7x's 64 MiB VMEM; on v6e/v5e larger
    tile_i_max / tile_j_max can be passed if B is huge.
    """
    B, L, K = ys.shape
    H = w1_t.shape[1]

    # Adaptive lane-dense tiles: (8, 128) f32 minimum for tiny B, capped so the
    # double-buffered output tile stays well under every generation's VMEM.
    tile_i = min(max(_round_up(B, 8), 8), tile_i_max)
    tile_j = min(max(_round_up(B, 128), 128), tile_j_max)
    bp_i = _round_up(B, tile_i)   # output rows  (label_energy axis)
    bp_j = _round_up(B, tile_j)   # output cols  (global_energy axis), lane-dense

    # Tiny precomputes outside the per-tile loop (pure O(B*F) / layout plumbing):
    #  - global_energy as a lane-major (1, bp_j) row (8 KiB-per-step kernel input)
    #  - ys[:, :, 1] pre-sliced so the kernel never gathers lane 1 of a 2-wide axis
    ge = jnp.sum(ys * potentials, axis=(1, 2))                       # (B,)
    ge_row = jnp.pad(ge, (0, bp_j - B)).reshape(1, bp_j)             # (1, bp_j)
    y1 = jnp.pad(ys[:, :, 1], ((0, bp_i - B), (0, 0)))               # (bp_i, L)

    grid = (bp_i // tile_i, bp_j // tile_j)

    # Explicit VMEM cap: 2x output tile (double buffer) + small inputs + slack,
    # clamped to [16 MiB, 48 MiB] -> safe on v5e/v6e (128 MiB) and v7x (64 MiB).
    vmem_needed = (2 * tile_i * tile_j * 4
                   + 2 * (tile_j * 4 + tile_i * L * 4)
                   + (L * H + H) * 4
                   + (4 << 20))
    vmem_limit = int(min(max(vmem_needed, 16 << 20), 48 << 20))

    out_pad = pl.pallas_call(
        global_energy_kernel,
        out_shape=jax.ShapeDtypeStruct((bp_i, bp_j), jnp.float32),
        grid=grid,
        in_specs=[
            pl.BlockSpec((1, tile_j), lambda i, j: (0, j)),   # ge row (column block)
            pl.BlockSpec((tile_i, L), lambda i, j: (i, 0)),   # y1 (row block)
            pl.BlockSpec((L, H), lambda i, j: (0, 0)),        # w1_t (resident)
            pl.BlockSpec((1, H), lambda i, j: (0, 0)),        # w2 row (resident)
        ],
        out_specs=pl.BlockSpec((tile_i, tile_j), lambda i, j: (i, j)),
        scratch_shapes=[pltpu.VMEM((tile_i, 1), jnp.float32)],   # hoisted label_energy
        compiler_params=pltpu.CompilerParams(
            dimension_semantics=("parallel", "arbitrary"),
            vmem_limit_bytes=vmem_limit),
    )(ge_row, y1, w1_t, w2_row)

    out = out_pad[:B, :B]
    if B == 1:
        # .squeeze(0) collapses label_energy to (1,); result is (1,)
        return out.reshape((1,))
    return out


def reference(ys, potentials, w1, w2):
    """Pure-JAX reference mirroring the PyTorch forward (PyTorch weight layout)."""
    ge = jnp.sum(ys * potentials, axis=(1, 2))           # (B,)
    y1 = ys[:, :, 1]                                     # (B, L)
    le = _softplus(y1 @ w1.T) @ w2.T                     # (B, 1)
    if le.shape[0] == 1:                                 # .squeeze(0)
        le = jnp.squeeze(le, axis=0)
    return ge + le


if __name__ == "__main__":
    # small shapes consistent with the module: ys/potentials (B, num_labels, 2)
    B, L, K, H = 2, 16, 2, 32   # batch, num_labels, 2, cfg.hidden_size

    key = jax.random.PRNGKey(0)
    k1, k2, k3, k4 = jax.random.split(key, 4)
    ys = jax.random.uniform(k1, (B, L, K), dtype=jnp.float32)
    potentials = jax.random.normal(k2, (B, L, K), dtype=jnp.float32)

    # deterministic Linear weights (PyTorch layout: (out_features, in_features)),
    # bias=False per the module definition
    b1 = 1.0 / math.sqrt(L)
    b2 = 1.0 / math.sqrt(H)
    w1 = jax.random.uniform(k3, (H, L), dtype=jnp.float32, minval=-b1, maxval=b1)
    w2 = jax.random.uniform(k4, (1, H), dtype=jnp.float32, minval=-b2, maxval=b2)

    # one-time weight relayout, outside the hot path
    w1_t, w2_row = prepare_weights(w1, w2)

    fwd = jax.jit(lambda ys_, pot_: global_energy_network(ys_, pot_, w1_t, w2_row))
    out = jax.block_until_ready(fwd(ys, potentials))
    ref = reference(ys, potentials, w1, w2)
    assert out.shape == ref.shape, (out.shape, ref.shape)
    assert jnp.allclose(out, ref, atol=1e-4, rtol=1e-4), "mismatch vs reference (B=2)"

    # B == 1 path (squeeze(0) collapses the batch dim)
    out1 = jax.block_until_ready(
        global_energy_network(ys[:1], potentials[:1], w1_t, w2_row))
    ref1 = reference(ys[:1], potentials[:1], w1, w2)
    assert out1.shape == ref1.shape, (out1.shape, ref1.shape)
    assert jnp.allclose(out1, ref1, atol=1e-4, rtol=1e-4), "mismatch vs reference (B=1)"

    print("KERNEL_OK")
</pallas_src>

<mosaic_0001>
module attributes {stable_mosaic.version = 11 : i64} {
  func.func @global_energy_kernel(%arg0: i32, %arg1: i32, %arg2: memref<1x128xf32, #tpu.memory_space<vmem>>, %arg3: memref<8x16xf32, #tpu.memory_space<vmem>>, %arg4: memref<16x32xf32, #tpu.memory_space<vmem>>, %arg5: memref<1x32xf32, #tpu.memory_space<vmem>>, %arg6: memref<8x128xf32, #tpu.memory_space<vmem>>, %arg7: memref<8x1xf32, #tpu.memory_space<vmem>>) attributes {dimension_semantics = [#tpu.dimension_semantics<parallel>, #tpu.dimension_semantics<arbitrary>], iteration_bounds = array<i64: 1, 1>, scalar_prefetch = 0 : i64, scratch_operands = 1 : i64, tpu.core_type = #tpu.core_type<tc>, window_params = [{transform_indices = @transform_0, window_bounds = array<i64: 1, 128>}, {transform_indices = @transform_1, window_bounds = array<i64: 8, 16>}, {pipeline_mode = #tpu.pipeline_mode<synchronous>, transform_indices = @transform_2, window_bounds = array<i64: 16, 32>}, {pipeline_mode = #tpu.pipeline_mode<synchronous>, transform_indices = @transform_3, window_bounds = array<i64: 1, 32>}, {transform_indices = @transform_4, window_bounds = array<i64: 8, 128>}]} {
    %c0_i32 = arith.constant 0 : i32
    %0 = arith.cmpi eq, %arg1, %c0_i32 : i32
    %1 = arith.extui %0 : i1 to i32
    %c0_i32_0 = arith.constant 0 : i32
    %2 = arith.cmpi ne, %1, %c0_i32_0 : i32
    scf.if %2 {
      %c0_6 = arith.constant 0 : index
      %c0_7 = arith.constant 0 : index
      %9 = vector.load %arg3[%c0_6, %c0_7] : memref<8x16xf32, #tpu.memory_space<vmem>>, vector<8x16xf32>
      %c0_8 = arith.constant 0 : index
      %c0_9 = arith.constant 0 : index
      %10 = vector.load %arg4[%c0_8, %c0_9] : memref<16x32xf32, #tpu.memory_space<vmem>>, vector<16x32xf32>
      %cst = arith.constant dense<0.000000e+00> : vector<8x32xf32>
      %11 = tpu.matmul %9, %10, %cst {dimension_numbers = #tpu.dot_dimension_numbers<[1], [0], [0], [1], [0, 0, 1, 1], [], []>} : vector<8x16xf32>, vector<16x32xf32>, vector<8x32xf32> -> vector<8x32xf32>
      %cst_10 = arith.constant 0.000000e+00 : f32
      %12 = vector.broadcast %cst_10 : f32 to vector<8x32xf32>
      %13 = arith.maximumf %11, %12 : vector<8x32xf32>
      %14 = math.absf %11 : vector<8x32xf32>
      %cst_11 = arith.constant 0.000000e+00 : f32
      %15 = vector.broadcast %cst_11 : f32 to vector<8x32xf32>
      %16 = arith.subf %15, %14 : vector<8x32xf32>
      %17 = math.exp %16 : vector<8x32xf32>
      %18 = math.log1p %17 : vector<8x32xf32>
      %19 = arith.addf %13, %18 : vector<8x32xf32>
      %c0_12 = arith.constant 0 : index
      %c0_13 = arith.constant 0 : index
      %20 = vector.load %arg5[%c0_12, %c0_13] : memref<1x32xf32, #tpu.memory_space<vmem>>, vector<1x32xf32>
      %21 = vector.broadcast %20 : vector<1x32xf32> to vector<8x32xf32>
      %22 = arith.mulf %19, %21 : vector<8x32xf32>
      %cst_14 = arith.constant dense<0.000000e+00> : vector<8xf32>
      %23 = vector.multi_reduction <add>, %22, %cst_14 [1] : vector<8x32xf32> to vector<8xf32>
      %24 = vector.shape_cast %23 : vector<8xf32> to vector<8x1xf32>
      %c0_15 = arith.constant 0 : index
      %c0_16 = arith.constant 0 : index
      %25 = vector.load %arg7[%c0_15, %c0_16] : memref<8x1xf32, #tpu.memory_space<vmem>>, vector<8x1xf32>
      tpu.vector_store %arg7[%c0_15, %c0_16], %24 {strides = array<i32>} : memref<8x1xf32, #tpu.memory_space<vmem>>, vector<8x1xf32>,
    } else {
    }
    %c0 = arith.constant 0 : index
    %c0_1 = arith.constant 0 : index
    %3 = vector.load %arg7[%c0, %c0_1] : memref<8x1xf32, #tpu.memory_space<vmem>>, vector<8x1xf32>
    %c0_2 = arith.constant 0 : index
    %c0_3 = arith.constant 0 : index
    %4 = vector.load %arg2[%c0_2, %c0_3] : memref<1x128xf32, #tpu.memory_space<vmem>>, vector<1x128xf32>
    %5 = vector.broadcast %3 : vector<8x1xf32> to vector<8x128xf32>
    %6 = vector.broadcast %4 : vector<1x128xf32> to vector<8x128xf32>
    %7 = arith.addf %5, %6 : vector<8x128xf32>
    %c0_4 = arith.constant 0 : index
    %c0_5 = arith.constant 0 : index
    %8 = vector.load %arg6[%c0_4, %c0_5] : memref<8x128xf32, #tpu.memory_space<vmem>>, vector<8x128xf32>
    tpu.vector_store %arg6[%c0_4, %c0_5], %7 {strides = array<i32>} : memref<8x128xf32, #tpu.memory_space<vmem>>, vector<8x128xf32>,
    return
  }
  func.func @transform_0(%arg0: i32, %arg1: i32) -> (i32, i32) {
    %c0_i32 = arith.constant 0 : i32
    %c0_i32_0 = arith.constant 0 : i32
    return %c0_i32, %arg1 : i32, i32
  }
  func.func @transform_1(%arg0: i32, %arg1: i32) -> (i32, i32) {
    %c0_i32 = arith.constant 0 : i32
    %c0_i32_0 = arith.constant 0 : i32
    return %arg0, %c0_i32 : i32, i32
  }
  func.func @transform_2(%arg0: i32, %arg1: i32) -> (i32, i32) {
    %c0_i32 = arith.constant 0 : i32
    %c0_i32_0 = arith.constant 0 : i32
    %c0_i32_1 = arith.constant 0 : i32
    return %c0_i32, %c0_i32_0 : i32, i32
  }
  func.func @transform_3(%arg0: i32, %arg1: i32) -> (i32, i32) {
    %c0_i32 = arith.constant 0 : i32
    %c0_i32_0 = arith.constant 0 : i32
    %c0_i32_1 = arith.constant 0 : i32
    return %c0_i32, %c0_i32_0 : i32, i32
  }
  func.func @transform_4(%arg0: i32, %arg1: i32) -> (i32, i32) {
    %c0_i32 = arith.constant 0 : i32
    return %arg0, %arg1 : i32, i32
  }
}

</mosaic_0001>

<llo_original>
// kernel: _lambda_.1
$region0: #{_lambda_.1}
  #allocation0 [shape = 'u32[]', space=smem, size = 0x4, offset = 0x4, fixed_abs, tag = 'smem constant byte address 0x4 - core index']
  #allocation1 [shape = 'u32[72,128]{1,0:T(1,128)}', space=vmem, size = 0x9000, scoped, tag = 'internal scratch']
  #allocation2 [shape = 'f32[8,1]{1,0:T(8,128)}', space=vmem, size = 0x1000, scoped, tag = 'scratch operand']
  %s0 = inlined_call_operand.vmem [shape: f32[1,128], index: 0, kind: input, shape index: {}]
  %s1 = inlined_call_operand.vmem [shape: f32[8,16], index: 1, kind: input, shape index: {}]
  %s2 = inlined_call_operand.vmem [shape: f32[16,32], index: 2, kind: input, shape index: {}]
  %s3 = inlined_call_operand.vmem [shape: f32[1,32], index: 3, kind: input, shape index: {}]
  %s4 = inlined_call_operand.vmem [shape: f32[8,128], index: 4, kind: output, shape index: {}]
  %s5 = sld [smem:[#allocation0]]
  $region30: #{_lambda_.1} parent=0
    _
  %s7 = ssub.s32 1, %s5
  %s8 = scalar_select 0, %s7, %s5
  // Predicated region
  $region2: #{_lambda_.1} parent=0 // pred_check
    _
  $region3: #{_lambda_.1} parent=0 // pred_check_branch
    %10 = sbr.rel (0) target = $region5
  $region4: #{_lambda_.1} parent=0 // pred_region
    _
  $region5: #{_lambda_.1} parent=0 // pred_fallthru
    _
  // Predicated region
  $region6: #{_lambda_.1} parent=0 // pred_check
    _
  $region7: #{_lambda_.1} parent=0 // pred_check_branch
    %12 = sbr.rel (0) target = $region9
  $region8: #{_lambda_.1} parent=0 // pred_region
    _
  $region9: #{_lambda_.1} parent=0 // pred_fallthru
    _
  // Predicated region
  $region10: #{_lambda_.1} parent=0 // pred_check
    _
  $region11: #{_lambda_.1} parent=0 // pred_check_branch
    %14 = sbr.rel (0) target = $region13
  $region12: #{_lambda_.1} parent=0 // pred_region
    _
  $region13: #{_lambda_.1} parent=0 // pred_fallthru
    _
  // Predicated region
  $region14: #{_lambda_.1} parent=0 // pred_check
    _
  $region15: #{_lambda_.1} parent=0 // pred_check_branch
    %16 = sbr.rel (0) target = $region17
  $region16: #{_lambda_.1} parent=0 // pred_region
    _
  $region17: #{_lambda_.1} parent=0 // pred_fallthru
    _
  %p17 = scmp.eq.s32.totalorder 0, 0
  // Predicated region
  $region18: #{_lambda_.1} parent=0 // pred_check
    %p18 = pneg %p17
  $region19: #{_lambda_.1} parent=0 // pred_check_branch
    %20 = sbr.rel (%p18) target = $region21
  $region20: #{_lambda_.1} parent=0 // pred_region
    %v21 = vld [vmem:[%s1] sm:$0xff]
    %v22 = vld [vmem:[%s2] sm:$0xff]
    %v23 = vld [vmem:[%s2 + $0x8] sm:$0xff]
    %vm24 = vcmask 130048
    %v26 = vsel %vm24, %v21, 0
    %28 = vmatpush.msra.mxu0 0.0
    %29 = vmatpush.msra.mxu0 0.0
    %30 = vmatpush.msra.mxu0 0.0
    %31 = vmatpush.msra.mxu0 0.0
    %32 = vmatpush.msra.mxu0 0.0
    %33 = vmatpush.msra.mxu0 0.0
    %34 = vmatpush.msra.mxu0 0.0
    %35 = vmatpush.msra.mxu0 0.0
    %36 = vmatpush.msra.mxu0 0.0
    %37 = vmatpush.msra.mxu0 0.0
    %38 = vmatpush.msra.mxu0 0.0
    %39 = vmatpush.msra.mxu0 0.0
    %40 = vmatpush.msra.mxu0 0.0
    %41 = vmatpush.msra.mxu0 0.0
    %42 = vmatpush.msra.mxu0 %v23
    %43 = vmatpush.msra.mxu0 %v22
    %44 = vmatmul.f32.gmra.mxu0 %v26
    %v45 = vpop.f32.mrf.mxu0
    %v46 = vadd.f32 0.0, %v45
    %47 = vdwg.mxu0
    %v48 = vmax.f32 %v46, 0.0
    %v49 = vand.u32 2147483647, %v46
    %v50 = vsub.f32 0.0, %v49
    %v51 = vmul.f32 %v50, 1.442695
    %v52 = vpow.pop %v51
    %v53 = vadd.f32 %v52, 1.0
    %v54 = vlog2.pop %v53
    %v55 = vmul.f32 %v54, 0.6931472
    %v56 = vmul.f32 -0.5, %v52
    %v57 = vadd.f32 %v56, 1.0
    %v58 = vmul.f32 %v57, %v52
    %v59 = vand.u32 2147483647, %v52
    %vm60 = vcmp.lt.f32.partialorder %v59, 0.0004427343
    %v61 = vsel %vm60, %v58, %v55
    %v62 = vadd.f32 %v48, %v61
    %v63 = vld [vmem:[%s3] sm:$0x1]
    %v65 = vperm.slane %v63, 0
    %v67 = vmul.f32 %v62, %v65
    %vm68 = vcmask 261120
    %v69 = vsel %vm68, %v67, 0.0
    %70 = vadd.xlane.f32.xlu0 %v69
    %v71 = vpop.xlane.xlu0 %70
    %vm72 = vcmask 7168
    %73 = vst.msk [vmem:[#allocation2] sm:$0xff] %vm72, %v71
  $region21: #{_lambda_.1} parent=0 // pred_fallthru
    _
  %v74 = vld [vmem:[#allocation2] sm:$0xff]
  %v75 = vld [vmem:[%s0] sm:$0x1]
  %77 = vset.pattern.permute.xlu0 0
  %78 = vperm.xlu0 %77, %v74
  %v79 = vpop.permute.xlu0 %78
  %v82 = vperm.slane %v75, 0
  %v84 = vadd.f32 %v79, %v82
  %85 = vst [vmem:[%s4] sm:$0xff] %v84
  // Predicated region
  $region22: #{_lambda_.1} parent=0 // pred_check
    _
  $region23: #{_lambda_.1} parent=0 // pred_check_branch
    %87 = sbr.rel (0) target = $region25
  $region24: #{_lambda_.1} parent=0 // pred_region
    _
  $region25: #{_lambda_.1} parent=0 // pred_fallthru
    _
  // Predicated region
  $region26: #{_lambda_.1} parent=0 // pred_check
    _
  $region27: #{_lambda_.1} parent=0 // pred_check_branch
    %89 = sbr.rel (0) target = $region29
  $region28: #{_lambda_.1} parent=0 // pred_region
    _
  $region29: #{_lambda_.1} parent=0 // pred_fallthru
    _

</llo_original>
